<compile_context>
chip_gen: v7x
topology: tpu7x:2x2x1
jax: 0.10.0
libtpu: 0.0.40
codegen_flags: <defaults>
</compile_context>

<pallas_src>
import numpy as np
import jax
import jax.numpy as jnp
from jax.experimental import pallas as pl
from jax.experimental.pallas import tpu as pltpu


# ----------------------------------------------------------------------------
# Kernel: streamed CE numerator (per-batch-tile partial sums).
# ----------------------------------------------------------------------------
def _make_ce_kernel(pad):
    """`pad` is static (baked into the kernel)."""

    def kernel(logits_ref, tgt_ref, ce_part_ref, acc):
        j = pl.program_id(1)            # vocab-tile index ("arbitrary" axis)
        nj = pl.num_programs(1)

        @pl.when(j == 0)
        def _init():
            acc[...] = jnp.zeros_like(acc)

        x = logits_ref[...].astype(jnp.float32)          # (tb, S, tv)
        tb, S, tv = x.shape

        # F.log_softmax over the *sequence* axis (dim=1), per (b, v) column.
        m = jnp.max(x, axis=1, keepdims=True)            # (tb, 1, tv)
        shifted = x - m                                  # reused by exp & gather
        lse = jnp.log(jnp.sum(jnp.exp(shifted), axis=1, keepdims=True))

        # One-hot-free gather along the vocab axis: each (b, s) target falls in
        # exactly one vocab tile, so accumulating the selected sum over vocab
        # tiles performs the gather exactly once.  The pad mask is folded into
        # the index (padded tokens become -1 and never match the lane iota),
        # so the masked gather collapses to one full-tile select + scalar sum.
        tgt = tgt_ref[...]                               # (tb, S) int32
        local_t = jnp.where(tgt > pad, tgt - j * tv, -1)
        lane = jax.lax.broadcasted_iota(jnp.int32, (1, 1, tv), 2)
        hit = local_t[:, :, None] == lane                # (tb, S, tv)

        acc[...] += jnp.sum(jnp.where(hit, shifted - lse, 0.0))

        @pl.when(j == nj - 1)
        def _emit():
            # Lane-dense (1, 8, 128) slab write; only [0, 0, 0] is meaningful.
            ce_part_ref[...] = jnp.broadcast_to(
                acc[...].reshape(1, 1, 1), ce_part_ref.shape)

    return kernel


# ----------------------------------------------------------------------------
# Chip-gated VMEM / tile settings.
# ----------------------------------------------------------------------------
def _chip_settings():
    """Returns (streamed-block byte budget, vmem_limit_bytes or None)."""
    try:
        kind = jax.devices()[0].device_kind.lower()
    except Exception:  # pragma: no cover - defensive
        kind = ""
    if "v7" in kind:
        # 64 MiB VMEM per TensorCore: small streamed block, modest scoped limit
        # (2x double-buffered input + ~4-6x f32/select temporaries per block).
        return 2 * 1024 * 1024, 40 * 1024 * 1024
    if "v5" in kind or "v6" in kind:
        # 128 MiB VMEM: larger blocks amortize the ~0.35 us/step overhead and
        # keep the (HBM-bound) pipeline full.
        return 6 * 1024 * 1024, 80 * 1024 * 1024
    # Unknown chip: conservative defaults, leave the scoped limit alone.
    return 2 * 1024 * 1024, None


def _round_up(x, m):
    return ((x + m - 1) // m) * m


def _maybe_pad_vocab(output, B, S, V, itemsize, budget):
    """If V is not a multiple of 128 AND a full-V block cannot fit the budget,
    pad the vocab axis so lane-aligned vocab tiles become available.  Padded
    columns never match any target id, so they contribute 0 to the CE sum."""
    if V % 128 == 0:
        return output, V
    min_tb = next((d for d in range(8, B + 1, 8) if B % d == 0), B)
    if min_tb * S * V * itemsize <= budget:
        return output, V
    pad_v = _round_up(V, 128) - V
    return jnp.pad(output, ((0, 0), (0, 0), (0, pad_v))), V + pad_v


def _choose_tiles(B, S, V, itemsize, budget):
    """Largest (tb, tv) streamed block <= budget, with tv a multiple-of-128
    divisor of V (or V itself) and tb a multiple-of-8 divisor of B (or B)."""
    tv_cands = sorted({d for d in range(128, V + 1, 128) if V % d == 0} | {V})
    tb_cands = sorted({d for d in range(8, B + 1, 8) if B % d == 0} | {B})
    fitting = [(tb * S * tv * itemsize, tb, tv)
               for tb in tb_cands for tv in tv_cands
               if tb * S * tv * itemsize <= budget]
    if fitting:
        _, tb, tv = max(fitting)      # biggest block that fits
    else:
        _, tb, tv = min((tb * S * tv * itemsize, tb, tv)
                        for tb in tb_cands for tv in tv_cands)
    return tb, tv


# ----------------------------------------------------------------------------
# Wrapper mirroring Loss.forward.
# ----------------------------------------------------------------------------
def loss_forward(output, target, mu, sigma,
                 pred_logp, labels_logp, pred_sas, labels_sas,
                 epoch, penalty_weights, beta,
                 *, pad, config, tile_b=None, tile_v=None):
    """`penalty_weights` is unused (the penalty block is commented out in torch)."""
    del penalty_weights
    pred_logp_on = bool(config.get("pred_logp"))
    pred_sas_on = bool(config.get("pred_sas"))

    target = target.astype(jnp.int32)
    B, S, V = output.shape
    itemsize = jnp.dtype(output.dtype).itemsize
    block_budget, vmem_limit = _chip_settings()

    # Robustness for vocab sizes that are not multiples of 128.
    output, V = _maybe_pad_vocab(output, B, S, V, itemsize, block_budget)

    tb, tv = _choose_tiles(B, S, V, itemsize, block_budget)
    if tile_b is not None:
        tb = tile_b
    if tile_v is not None:
        tv = tile_v
    assert B % tb == 0 and V % tv == 0, (B, V, tb, tv)

    ni, nj = B // tb, V // tv
    kernel = _make_ce_kernel(pad)

    cost = pl.CostEstimate(
        flops=int(8 * B * S * V),
        transcendentals=int(B * S * V + B * V),
        bytes_accessed=int(B * S * V * itemsize + B * S * 4 + ni * 8 * 128 * 4),
    )

    partials = pl.pallas_call(
        kernel,
        grid=(ni, nj),
        in_specs=[
            # streamed logits tile (NATIVE dtype; cast per tile in the kernel)
            pl.BlockSpec((tb, S, tv), lambda i, j: (i, 0, j)),
            # per-batch-tile targets, resident across the vocab loop
            pl.BlockSpec((tb, S), lambda i, j: (i, 0)),
        ],
        out_specs=pl.BlockSpec((1, 8, 128), lambda i, j: (i, 0, 0)),
        out_shape=jax.ShapeDtypeStruct((ni, 8, 128), jnp.float32),
        scratch_shapes=[pltpu.VMEM((1, 1), jnp.float32)],   # per-batch-tile CE acc
        compiler_params=pltpu.CompilerParams(
            # Batch axis "parallel" (megacore shardable on v7x); vocab axis
            # "arbitrary" because the output block + accumulator are resident
            # across it.
            dimension_semantics=("parallel", "arbitrary"),
            vmem_limit_bytes=vmem_limit,
        ),
        cost_estimate=cost,
    )(output, target)

    # ---- tiny scalar glue in plain JAX (trivially cheap fused reduces) ------
    ce_sum = jnp.sum(partials[:, 0, 0])

    mask = (target > pad).astype(jnp.float32)
    nb_tokens = jnp.sum(mask)
    # NOTE: if every target is <= pad, nb_tokens is 0 and CE is inf/NaN — same
    # behavior as the torch reference.
    ce_loss = -ce_sum / nb_tokens

    mu32 = mu.astype(jnp.float32)
    sig32 = sigma.astype(jnp.float32)
    kl_loss = -0.5 * jnp.sum(1.0 + sig32 - mu32 * mu32 - jnp.exp(sig32))

    beta_e = jnp.asarray(beta, jnp.float32)[epoch]

    # TODO(synk): torch computes these MSEs in float64; TPU uses float32.
    logp_loss = None
    sas_loss = None
    extra = jnp.float32(0.0)
    if pred_logp_on:
        d = pred_logp.astype(jnp.float32) - labels_logp.astype(jnp.float32)
        logp_loss = jnp.mean(d * d)
        extra = extra + logp_loss
    if pred_sas_on:
        d = pred_sas.astype(jnp.float32) - labels_sas.astype(jnp.float32)
        sas_loss = jnp.mean(d * d)
        extra = extra + sas_loss

    # torch: `if KL_loss > 10000000:` -> data-dependent select.
    total_loss = jnp.where(kl_loss > 1e7,
                           ce_loss + extra,
                           ce_loss + beta_e * kl_loss + extra)

    return total_loss, ce_loss, kl_loss, logp_loss, sas_loss


# ----------------------------------------------------------------------------
# Pure-JAX reference + tests.
# ----------------------------------------------------------------------------
def _reference(output, target, mu, sigma, pred_logp, labels_logp,
               pred_sas, labels_sas, epoch, beta, pad):
    out = output.astype(jnp.float32)
    logsm = jax.nn.log_softmax(out, axis=1)
    V = out.shape[2]
    t = target.reshape(-1)
    o = logsm.reshape(-1, V)
    mask = (t > pad).astype(jnp.float32)
    nb = jnp.sum(mask)
    gathered = o[jnp.arange(o.shape[0]), t] * mask
    ce = -jnp.sum(gathered) / nb
    kl = -0.5 * jnp.sum(1.0 + sigma - mu ** 2 - jnp.exp(sigma))
    logp = jnp.mean((pred_logp - labels_logp) ** 2)
    sas = jnp.mean((pred_sas - labels_sas) ** 2)
    total = jnp.where(kl > 1e7, ce + logp + sas,
                      ce + beta[epoch] * kl + logp + sas)
    return total, ce, kl, logp, sas


def _run_case(key, B, S, V, Z, epoch, beta, pad, config,
              logits_dtype=jnp.float32, tile_b=None, tile_v=None,
              rtol=1e-4, atol=1e-5):
    ks = jax.random.split(key, 8)
    output = jax.random.normal(ks[0], (B, S, V), jnp.float32).astype(logits_dtype)
    target = jax.random.randint(ks[1], (B, S), 0, V, jnp.int32)
    mu = jax.random.normal(ks[2], (B, Z), jnp.float32) * 0.1
    sigma = jax.random.normal(ks[3], (B, Z), jnp.float32) * 0.1
    pred_logp = jax.random.normal(ks[4], (B, 1), jnp.float32)
    labels_logp = jax.random.normal(ks[5], (B, 1), jnp.float32)
    pred_sas = jax.random.normal(ks[6], (B, 1), jnp.float32)
    labels_sas = jax.random.normal(ks[7], (B, 1), jnp.float32)

    got = loss_forward(output, target, mu, sigma,
                       pred_logp, labels_logp, pred_sas, labels_sas,
                       epoch, None, beta, pad=pad, config=config,
                       tile_b=tile_b, tile_v=tile_v)
    got = jax.block_until_ready(got)

    want = _reference(output, target, mu, sigma, pred_logp, labels_logp,
                      pred_sas, labels_sas, epoch, beta, pad)
    for g, w in zip(got, want):
        np.testing.assert_allclose(np.asarray(g), np.asarray(w),
                                   rtol=rtol, atol=atol)


if __name__ == "__main__":
    config = {"pred_logp": True, "pred_sas": True}
    beta = jnp.linspace(0.0, 1.0, 5, dtype=jnp.float32)
    PAD = 0

    # Test 1: tiny shapes, single grid step, f32 logits, V < 128 (full-dim tile).
    _run_case(jax.random.PRNGKey(0), B=2, S=8, V=32, Z=16,
              epoch=1, beta=beta, pad=PAD, config=config)

    # Test 2: multi-tile grid (2 x 2), bf16 logits streamed in native dtype,
    # exercises the per-batch-tile partial CE outputs, cross-vocab-tile gather
    # accumulation, and the "parallel" batch axis.
    _run_case(jax.random.PRNGKey(1), B=16, S=16, V=256, Z=8,
              epoch=3, beta=beta, pad=PAD, config=config,
              logits_dtype=jnp.bfloat16, tile_b=8, tile_v=128,
              rtol=1e-3, atol=1e-4)

    print("KERNEL_OK")
</pallas_src>

<mosaic_0001>
module attributes {stable_mosaic.version = 11 : i64} {
  func.func @kernel(%arg0: i32, %arg1: i32, %arg2: memref<2x8x32xf32, #tpu.memory_space<vmem>>, %arg3: memref<2x8xi32, #tpu.memory_space<vmem>>, %arg4: memref<1x8x128xf32, #tpu.memory_space<vmem>>, %arg5: memref<1x1xf32, #tpu.memory_space<vmem>>) attributes {dimension_semantics = [#tpu.dimension_semantics<parallel>, #tpu.dimension_semantics<arbitrary>], iteration_bounds = array<i64: 1, 1>, scalar_prefetch = 0 : i64, scratch_operands = 1 : i64, tpu.core_type = #tpu.core_type<tc>, window_params = [{transform_indices = @transform_0, window_bounds = array<i64: 2, 8, 32>}, {transform_indices = @transform_1, window_bounds = array<i64: 2, 8>}, {transform_indices = @transform_2, window_bounds = array<i64: 1, 8, 128>}]} {
    %c0_i32 = arith.constant 0 : i32
    %0 = arith.cmpi eq, %arg1, %c0_i32 : i32
    %1 = arith.extui %0 : i1 to i32
    %c0_i32_0 = arith.constant 0 : i32
    %2 = arith.cmpi ne, %1, %c0_i32_0 : i32
    scf.if %2 {
      %cst_15 = arith.constant 0.000000e+00 : f32
      %40 = vector.broadcast %cst_15 : f32 to vector<1x1xf32>
      %c0_16 = arith.constant 0 : index
      %c0_17 = arith.constant 0 : index
      %41 = vector.load %arg5[%c0_16, %c0_17] : memref<1x1xf32, #tpu.memory_space<vmem>>, vector<1x1xf32>
      tpu.vector_store %arg5[%c0_16, %c0_17], %40 {strides = array<i32>} : memref<1x1xf32, #tpu.memory_space<vmem>>, vector<1x1xf32>,
    } else {
    }
    %c0 = arith.constant 0 : index
    %c0_1 = arith.constant 0 : index
    %c0_2 = arith.constant 0 : index
    %3 = vector.load %arg2[%c0, %c0_1, %c0_2] : memref<2x8x32xf32, #tpu.memory_space<vmem>>, vector<2x8x32xf32>
    %cst = arith.constant dense<0xFF800000> : vector<2x32xf32>
    %4 = vector.multi_reduction <maximumf>, %3, %cst [1] : vector<2x8x32xf32> to vector<2x32xf32>
    %5 = vector.shape_cast %4 : vector<2x32xf32> to vector<2x1x32xf32>
    %6 = vector.broadcast %5 : vector<2x1x32xf32> to vector<2x8x32xf32>
    %7 = arith.subf %3, %6 : vector<2x8x32xf32>
    %8 = math.exp %7 : vector<2x8x32xf32>
    %cst_3 = arith.constant dense<0.000000e+00> : vector<2x32xf32>
    %9 = vector.multi_reduction <add>, %8, %cst_3 [1] : vector<2x8x32xf32> to vector<2x32xf32>
    %10 = vector.shape_cast %9 : vector<2x32xf32> to vector<2x1x32xf32>
    %11 = math.log %10 : vector<2x1x32xf32>
    %c0_4 = arith.constant 0 : index
    %c0_5 = arith.constant 0 : index
    %12 = vector.load %arg3[%c0_4, %c0_5] : memref<2x8xi32, #tpu.memory_space<vmem>>, vector<2x8xi32>
    %c0_i32_6 = arith.constant 0 : i32
    %13 = vector.broadcast %c0_i32_6 : i32 to vector<2x8xi32>
    %14 = arith.cmpi sgt, %12, %13 : vector<2x8xi32>
    %c32_i32 = arith.constant 32 : i32
    %15 = arith.muli %arg1, %c32_i32 : i32
    %16 = vector.broadcast %15 : i32 to vector<2x8xi32>
    %17 = arith.subi %12, %16 : vector<2x8xi32>
    %c-1_i32 = arith.constant -1 : i32
    %18 = vector.broadcast %c-1_i32 : i32 to vector<2x8xi32>
    %19 = arith.select %14, %17, %18 : vector<2x8xi1>, vector<2x8xi32>
    %20 = tpu.iota {dimensions = array<i32: 2>} : vector<1x1x32xi32>
    %21 = vector.shape_cast %19 : vector<2x8xi32> to vector<2x8x1xi32>
    %22 = vector.broadcast %21 : vector<2x8x1xi32> to vector<2x8x32xi32>
    %23 = vector.broadcast %20 : vector<1x1x32xi32> to vector<2x8x32xi32>
    %24 = arith.cmpi eq, %22, %23 : vector<2x8x32xi32>
    %c0_7 = arith.constant 0 : index
    %c0_8 = arith.constant 0 : index
    %25 = vector.load %arg5[%c0_7, %c0_8] : memref<1x1xf32, #tpu.memory_space<vmem>>, vector<1x1xf32>
    %26 = vector.broadcast %11 : vector<2x1x32xf32> to vector<2x8x32xf32>
    %27 = arith.subf %7, %26 : vector<2x8x32xf32>
    %cst_9 = arith.constant 0.000000e+00 : f32
    %28 = vector.broadcast %cst_9 : f32 to vector<2x8x32xf32>
    %29 = arith.select %24, %27, %28 : vector<2x8x32xi1>, vector<2x8x32xf32>
    %30 = vector.shape_cast %29 : vector<2x8x32xf32> to vector<1x2x8x32xf32>
    %cst_10 = arith.constant dense<0.000000e+00> : vector<1xf32>
    %31 = vector.multi_reduction <add>, %30, %cst_10 [1, 2, 3] : vector<1x2x8x32xf32> to vector<1xf32>
    %32 = vector.shape_cast %31 : vector<1xf32> to vector<1x1x1x1xf32>
    %33 = vector.extract %32[0, 0, 0, 0] : f32 from vector<1x1x1x1xf32>
    %34 = vector.broadcast %33 : f32 to vector<1x1xf32>
    %35 = arith.addf %25, %34 : vector<1x1xf32>
    %c0_11 = arith.constant 0 : index
    %c0_12 = arith.constant 0 : index
    %36 = vector.load %arg5[%c0_11, %c0_12] : memref<1x1xf32, #tpu.memory_space<vmem>>, vector<1x1xf32>
    tpu.vector_store %arg5[%c0_11, %c0_12], %35 {strides = array<i32>} : memref<1x1xf32, #tpu.memory_space<vmem>>, vector<1x1xf32>,
    %c0_i32_13 = arith.constant 0 : i32
    %37 = arith.cmpi eq, %arg1, %c0_i32_13 : i32
    %38 = arith.extui %37 : i1 to i32
    %c0_i32_14 = arith.constant 0 : i32
    %39 = arith.cmpi ne, %38, %c0_i32_14 : i32
    scf.if %39 {
      %c0_15 = arith.constant 0 : index
      %c0_16 = arith.constant 0 : index
      %40 = vector.load %arg5[%c0_15, %c0_16] : memref<1x1xf32, #tpu.memory_space<vmem>>, vector<1x1xf32>
      %41 = vector.shape_cast %40 : vector<1x1xf32> to vector<1x1x1xf32>
      %42 = vector.shape_cast %41 : vector<1x1x1xf32> to vector<1x1x1xf32>
      %43 = vector.broadcast %42 : vector<1x1x1xf32> to vector<1x8x128xf32>
      %c0_17 = arith.constant 0 : index
      %c0_18 = arith.constant 0 : index
      %c0_19 = arith.constant 0 : index
      %44 = vector.load %arg4[%c0_17, %c0_18, %c0_19] : memref<1x8x128xf32, #tpu.memory_space<vmem>>, vector<1x8x128xf32>
      tpu.vector_store %arg4[%c0_17, %c0_18, %c0_19], %43 {strides = array<i32>} : memref<1x8x128xf32, #tpu.memory_space<vmem>>, vector<1x8x128xf32>,
    } else {
    }
    return
  }
  func.func @transform_0(%arg0: i32, %arg1: i32) -> (i32, i32, i32) {
    %c0_i32 = arith.constant 0 : i32
    %c0_i32_0 = arith.constant 0 : i32
    return %arg0, %c0_i32, %arg1 : i32, i32, i32
  }
  func.func @transform_1(%arg0: i32, %arg1: i32) -> (i32, i32) {
    %c0_i32 = arith.constant 0 : i32
    %c0_i32_0 = arith.constant 0 : i32
    return %arg0, %c0_i32 : i32, i32
  }
  func.func @transform_2(%arg0: i32, %arg1: i32) -> (i32, i32, i32) {
    %c0_i32 = arith.constant 0 : i32
    %c0_i32_0 = arith.constant 0 : i32
    %c0_i32_1 = arith.constant 0 : i32
    return %arg0, %c0_i32, %c0_i32_0 : i32, i32, i32
  }
}

</mosaic_0001>

<llo_original>
// kernel: tpu_custom_call.1
$region0: #{tpu_custom_call.1}
  #allocation0 [shape = 'u32[]', space=smem, size = 0x4, offset = 0x4, fixed_abs, tag = 'smem constant byte address 0x4 - core index']
  #allocation1 [shape = 'u32[144,128]{1,0:T(1,128)}', space=vmem, size = 0x12000, scoped, tag = 'internal scratch']
  #allocation2 [shape = 'f32[1,1]{1,0:T(1,128)}', space=vmem, size = 0x200, scoped, tag = 'scratch operand']
  %s0 = inlined_call_operand.hbm [shape: f32[2,8,32], index: 0, kind: input, shape index: {}]
  %s1 = inlined_call_operand.vmem [shape: s32[2,8], index: 1, kind: input, shape index: {}]
  %s2 = inlined_call_operand.hbm [shape: f32[1,8,128], index: 2, kind: output, shape index: {}]
  %s3 = sld [smem:[#allocation0]]
  $region30: #{tpu_custom_call.1} parent=0
    _
  %s5 = ssub.s32 1, %s3
  %s6 = scalar_select 0, %s5, %s3
  $region1: #{tpu_custom_call.1} parent=0
    #allocation3 [shape = 'u8[8192]{0}', space=vmem, size = 0x2000, scoped, tag = 'input window, operand 0, single buffered']
    #allocation4 [shape = 's32[1]{0}', space=sflag, size = 0x4, scoped, tag = 'scoped memory for tpu_custom_call.1']
    #allocation5 [shape = 's32[1]{0}', space=sflag, size = 0x4, scoped, tag = 'scoped memory for tpu_custom_call.1']
    #allocation6 [shape = 'u8[4096]{0}', space=vmem, size = 0x1000, scoped, tag = 'output window, operand 0, single buffered']
    %7 = vsyncpa [#allocation4], 0
    %8 = vsyncpa [#allocation5], 0
    // Predicated region
    $region2: #{tpu_custom_call.1} parent=1 // pred_check
      _
    $region3: #{tpu_custom_call.1} parent=1 // pred_check_branch
      %10 = sbr.rel (0) target = $region5
    $region4: #{tpu_custom_call.1} parent=1 // pred_region
      %s12 = ssub.s32 256, 256
      %13 = vsyncadd [#allocation4], %s12
      %s14 = sshll.u32 [#allocation3], 4
      %s15 = int_to_ptr.vmem [resolvable:$true] %s14
      %20 = dma.hbm_to_vmem [thread:$0]  %s0, 256, %s15, [#allocation4], 128, 128, 8
    $region5: #{tpu_custom_call.1} parent=1 // pred_fallthru
      _
    // Predicated region
    $region6: #{tpu_custom_call.1} parent=1 // pred_check
      _
    $region7: #{tpu_custom_call.1} parent=1 // pred_check_branch
      %22 = sbr.rel (0) target = $region9
    $region8: #{tpu_custom_call.1} parent=1 // pred_region
      _
    $region9: #{tpu_custom_call.1} parent=1 // pred_fallthru
      _
    // Predicated region
    $region10: #{tpu_custom_call.1} parent=1 // pred_check
      _
    $region11: #{tpu_custom_call.1} parent=1 // pred_check_branch
      %24 = sbr.rel (0) target = $region13
    $region12: #{tpu_custom_call.1} parent=1 // pred_region
      %25 = dma.done [#allocation4], 256
    $region13: #{tpu_custom_call.1} parent=1 // pred_fallthru
      _
    %p26 = scmp.eq.s32.totalorder 0, 0
    // Predicated region
    $region14: #{tpu_custom_call.1} parent=1 // pred_check
      %p27 = pneg %p26
    $region15: #{tpu_custom_call.1} parent=1 // pred_check_branch
      %29 = sbr.rel (%p27) target = $region17
    $region16: #{tpu_custom_call.1} parent=1 // pred_region
      %vm30 = vcmask 0
      %31 = vst.msk [vmem:[#allocation2] sm:$0x1] %vm30, 0.0
    $region17: #{tpu_custom_call.1} parent=1 // pred_fallthru
      _
    %v32 = vld [vmem:[#allocation3] sm:$0xff]
    %v33 = vld [vmem:[#allocation3 + $0x8] sm:$0xff]
    %vm34 = vcmask 261120
    %v35 = vsel %vm34, %v32, -inf
    %v36 = vrot.slane %v35, 4
    %v37 = vmax.f32 %v35, %v36
    %v38 = vrot.slane %v37, 2
    %v39 = vmax.f32 %v37, %v38
    %v40 = vrot.slane %v39, 1
    %v41 = vmax.f32 %v39, %v40
    %v42 = vsel %vm34, %v33, -inf
    %v43 = vrot.slane %v42, 4
    %v44 = vmax.f32 %v42, %v43
    %v45 = vrot.slane %v44, 2
    %v46 = vmax.f32 %v44, %v45
    %v47 = vrot.slane %v46, 1
    %v48 = vmax.f32 %v46, %v47
    %v49 = vsub.f32 %v32, %v41
    %v50 = vsub.f32 %v33, %v48
    %v51 = vmul.f32 %v49, 1.442695
    %v52 = vpow.pop %v51
    %v53 = vmul.f32 %v50, 1.442695
    %v54 = vpow.pop %v53
    %v55 = vsel %vm34, %v52, 0.0
    %v56 = vrot.slane %v55, 4
    %v57 = vadd.f32 %v55, %v56
    %v58 = vrot.slane %v57, 2
    %v59 = vadd.f32 %v57, %v58
    %v60 = vrot.slane %v59, 1
    %v61 = vadd.f32 %v59, %v60
    %v62 = vsel %vm34, %v54, 0.0
    %v63 = vrot.slane %v62, 4
    %v64 = vadd.f32 %v62, %v63
    %v65 = vrot.slane %v64, 2
    %v66 = vadd.f32 %v64, %v65
    %v67 = vrot.slane %v66, 1
    %v68 = vadd.f32 %v66, %v67
    %v69 = vlog2.pop %v61
    %v70 = vmul.f32 %v69, 0.6931472
    %v71 = vlog2.pop %v68
    %v72 = vmul.f32 %v71, 0.6931472
    %v73 = vld [vmem:[%s1] sm:$0x3]
    %vm74 = vcmp.gt.s32.totalorder %v73, 0
    %s75 = smul.u32 0, 32
    %v76 = vstv %s75
    %v77 = vsub.s32 %v73, %v76
    %v78 = vsel %vm74, %v77, 4294967295
    %v79 = vlaneseq
    %v80 = vand.u32 %v79, 127
    %v81 = vlaneseq
    %v82 = vshrl.u32 %v81, 7
    %v83 = vsub.s32 0, %v82
    %v84 = vrot.slane %v78, %v83
    %86 = vbcast.lane.b32.xlu0 %v84, 256
    %v87 = vpop.permute.xlu0 %86
    %v88 = vlaneseq
    %v89 = vshrl.u32 %v88, 7
    %v90 = vsub.s32 1, %v89
    %v91 = vrot.slane %v78, %v90
    %93 = vbcast.lane.b32.xlu0 %v91, 256
    %v94 = vpop.permute.xlu0 %93
    %vm95 = vcmp.eq.s32.totalorder %v87, %v80
    %vm96 = vcmp.eq.s32.totalorder %v94, %v80
    %v97 = vld [vmem:[#allocation2] sm:$0x1]
    %v98 = vsub.f32 %v49, %v70
    %v99 = vsub.f32 %v50, %v72
    %v100 = vsel %vm95, %v98, 0.0
    %v101 = vsel %vm96, %v99, 0.0
    %v102 = vsel %vm34, %v100, 0.0
    %v103 = vsel %vm34, %v101, 0.0
    %v104 = vadd.f32 %v102, %v103
    %105 = vadd.xlane.f32.xlu0 %v104
    %v106 = vpop.xlane.xlu0 %105
    %v107 = vrot.slane %v106, 4
    %v108 = vadd.f32 %v106, %v107
    %v109 = vrot.slane %v108, 2
    %v110 = vadd.f32 %v108, %v109
    %v111 = vrot.slane %v110, 1
    %v112 = vadd.f32 %v110, %v111
    %s113 = vtos %v112
    %v114 = vstv %s113
    %v115 = vadd.f32 %v97, %v114
    %vm116 = vcmask 0
    %117 = vst.msk [vmem:[#allocation2] sm:$0x1] %vm116, %v115
    // Predicated region
    $region18: #{tpu_custom_call.1} parent=1 // pred_check
      %p118 = pneg %p26
    $region19: #{tpu_custom_call.1} parent=1 // pred_check_branch
      %120 = sbr.rel (%p118) target = $region21
    $region20: #{tpu_custom_call.1} parent=1 // pred_region
      %v121 = vld [vmem:[#allocation2] sm:$0x1]
      %v123 = vlaneseq
      %v124 = vshrl.u32 %v123, 7
      %v125 = vsub.s32 0, %v124
      %v126 = vrot.slane %v121, %v125
      %127 = vset.pattern.permute.xlu0 0
      %128 = vperm.xlu0 %127, %v126
      %v129 = vpop.permute.xlu0 %128
      %131 = vst [vmem:[#allocation6] sm:$0xff] %v129
    $region21: #{tpu_custom_call.1} parent=1 // pred_fallthru
      _
    // Predicated region
    $region22: #{tpu_custom_call.1} parent=1 // pred_check
      _
    $region23: #{tpu_custom_call.1} parent=1 // pred_check_branch
      %133 = sbr.rel (0) target = $region25
    $region24: #{tpu_custom_call.1} parent=1 // pred_region
      %s135 = ssub.s32 128, 128
      %136 = vsyncadd [#allocation5], %s135
      %s138 = sshll.u32 [#allocation6], 4
      %s139 = int_to_ptr.vmem [resolvable:$true] %s138
      %141 = dma.vmem_to_hbm [thread:$0]  %s139, 128, %s2, [#allocation5]
    $region25: #{tpu_custom_call.1} parent=1 // pred_fallthru
      _
    // Predicated region
    $region26: #{tpu_custom_call.1} parent=1 // pred_check
      _
    $region27: #{tpu_custom_call.1} parent=1 // pred_check_branch
      %143 = sbr.rel (0) target = $region29
    $region28: #{tpu_custom_call.1} parent=1 // pred_region
      %144 = dma.done [#allocation5], 128
    $region29: #{tpu_custom_call.1} parent=1 // pred_fallthru
      _
    %145 = vsyncpa [#allocation4], 1
    %146 = vsyncpa [#allocation5], 1

</llo_original>
